<compile_context>
chip_gen: v7x
topology: tpu7x:2x2x1
jax: 0.10.0
libtpu: 0.0.40
codegen_flags: <defaults>
</compile_context>

<pallas_src>
import jax
import jax.numpy as jnp
from jax import lax
from jax.experimental import pallas as pl
from jax.experimental.pallas import tpu as pltpu


def _round_up(x, m):
    return ((x + m - 1) // m) * m


# ---------------------------------------------------------------------------
# Kernel
# ---------------------------------------------------------------------------
def global_disc_kernel(lang_ref, vis_ref, w0a_ref, w0b_ref, b0_ref,
                       w1_ref, b1_ref, w2_ref, b2_ref, out_ref):
    # Activations arrive in f32 straight from HBM; cast to bf16 at load time
    # for the MXU.  Accumulation / bias / ReLU stay in f32 (v5e-safe).
    lang = lang_ref[...].astype(jnp.bfloat16)
    vis = vis_ref[...].astype(jnp.bfloat16)

    # l0: split-weight linear (implicit concat: x @ W0 == lang@W0a + vis@W0b)
    h0 = (jnp.dot(lang, w0a_ref[...], preferred_element_type=jnp.float32)
          + jnp.dot(vis, w0b_ref[...], preferred_element_type=jnp.float32)
          + b0_ref[...])
    h0 = jnp.maximum(h0, 0.0)

    # l1: linear + relu
    h1 = (jnp.dot(h0.astype(jnp.bfloat16), w1_ref[...],
                  preferred_element_type=jnp.float32)
          + b1_ref[...])
    h1 = jnp.maximum(h1, 0.0)

    # l2 (H -> 1), emitted lane-dense: contract the H (lane) axis of both
    # operands so the per-batch-row result lands along lanes -> (8, TILE_B).
    # w2 is replicated across 8 sublanes; row 0 carries the answer.
    r = lax.dot_general(
        w2_ref[...], h1,
        dimension_numbers=(((1,), (1,)), ((), ())),
        preferred_element_type=jnp.float32)
    out_ref[...] = (r[0:1, :] + b2_ref[0, 0])[None].astype(out_ref.dtype)


# ---------------------------------------------------------------------------
# Parameter preparation (one-time, outside the hot path)
# ---------------------------------------------------------------------------
def prepare_params(p, dl):
    """Convert torch nn.Linear layout ([out,in]) to kernel layout.

    W0 is split row-wise at `dl` (language width) so the kernel never needs a
    concatenated activation tensor.
    """
    w0t = p["w0"].T  # [Din, H]
    return {
        "w0a": w0t[:dl].astype(jnp.bfloat16),                 # [Dl, H] bf16
        "w0b": w0t[dl:].astype(jnp.bfloat16),                 # [Dv, H] bf16
        "b0": p["b0"].reshape(1, -1).astype(jnp.float32),     # [1, H]  f32
        "w1": p["w1"].T.astype(jnp.bfloat16),                 # [H, H]  bf16
        "b1": p["b1"].reshape(1, -1).astype(jnp.float32),     # [1, H]  f32
        # l2 row replicated across 8 sublanes (full MXU tile), f32 for accuracy
        "w2": jnp.tile(p["w2"].reshape(1, -1), (8, 1)).astype(jnp.float32),
        "b2": p["b2"].reshape(1, 1).astype(jnp.float32),      # (1,1) SMEM
    }


# ---------------------------------------------------------------------------
# Tiling heuristics
# ---------------------------------------------------------------------------
def _working_set_bytes(tile_b, din, h, single_buffer_weights):
    wb = 1 if single_buffer_weights else 2
    weights = wb * 2 * (din * h + h * h)          # bf16 W0a+W0b, W1
    weights += wb * 4 * (8 * h + 2 * h)           # f32 w2 (8,H) + bias rows
    acts_in = 2 * 4 * tile_b * din                # f32 input tiles, 2x buffered
    out_t = 2 * 4 * tile_b                        # f32 output rows, 2x buffered
    interm = 3 * 4 * tile_b * h                   # h0/h1 f32 temporaries + slack
    return weights + acts_in + out_t + interm


def _choose_tile_b(B, din, h):
    if B <= 8:
        return 8
    # Aim for >=2 grid steps (pipeline overlap; on v7x the "parallel" batch
    # axis shards across the two TensorCores), tiles up to 512 rows to
    # amortize the ~0.35us/step pipeline overhead.
    tile = min(512, _round_up(pl.cdiv(B, 2), 8))
    # Clamp by VMEM (v7x has only 64 MiB physical per TensorCore).
    while tile > 8 and _working_set_bytes(tile, din, h, True) > (40 << 20):
        tile //= 2
    return max(8, _round_up(tile, 8))


def _vmem_limit_bytes(tile_b, din, h, single_buffer_weights):
    est = _working_set_bytes(tile_b, din, h, single_buffer_weights)
    # Generous headroom for compiler-internal scratch, but stay under the
    # v7x 64 MiB physical VMEM per TensorCore.
    return int(min(60 << 20, max(32 << 20, 2 * est)))


# ---------------------------------------------------------------------------
# Wrapper
# ---------------------------------------------------------------------------
def global_discriminator(language, visual, prepped):
    """language: [B, Dl], visual: [B, Dv]  ->  [B, 1] (matches torch module)."""
    B, Dl = language.shape
    Dv = visual.shape[1]
    Din = Dl + Dv
    H = prepped["w0a"].shape[1]

    TILE_B = _choose_tile_b(B, Din, H)
    num_tiles = pl.cdiv(B, TILE_B)

    flops = 2 * B * (Din * H + H * H + H)
    bytes_accessed = (4 * B * (Din + 1)                      # activations + out
                      + 2 * (Din * H + H * H)                # bf16 weights
                      + 4 * (8 * H + 2 * H + 1))             # f32 w2 + biases

    def build(single_buffer_weights):
        if single_buffer_weights:
            def wspec(shape):
                return pl.BlockSpec(shape, lambda i: (0, 0),
                                    pipeline_mode=pl.Buffered(1))
        else:
            def wspec(shape):
                return pl.BlockSpec(shape, lambda i: (0, 0))

        in_specs = [
            # activations: tiled over batch, pipelined
            pl.BlockSpec((TILE_B, Dl), lambda i: (i, 0)),
            pl.BlockSpec((TILE_B, Dv), lambda i: (i, 0)),
            # resident weights / biases (constant index map)
            wspec((Dl, H)),
            wspec((Dv, H)),
            wspec((1, H)),
            wspec((H, H)),
            wspec((1, H)),
            wspec((8, H)),
            # final bias as an SMEM scalar
            pl.BlockSpec((1, 1), lambda i: (0, 0),
                         memory_space=pltpu.MemorySpace.SMEM),
        ]
        return pl.pallas_call(
            global_disc_kernel,
            out_shape=jax.ShapeDtypeStruct((num_tiles, 1, TILE_B), jnp.float32),
            grid=(num_tiles,),
            in_specs=in_specs,
            # lane-dense output: one (1, TILE_B) row per grid step
            out_specs=pl.BlockSpec((1, 1, TILE_B), lambda i: (i, 0, 0)),
            compiler_params=pltpu.CompilerParams(
                dimension_semantics=("parallel",),
                vmem_limit_bytes=_vmem_limit_bytes(
                    TILE_B, Din, H, single_buffer_weights)),
            cost_estimate=pl.CostEstimate(
                flops=flops, transcendentals=0,
                bytes_accessed=bytes_accessed),
        )

    args = (language, visual,
            prepped["w0a"], prepped["w0b"], prepped["b0"],
            prepped["w1"], prepped["b1"], prepped["w2"], prepped["b2"])

    try:
        out = build(True)(*args)
    except Exception:
        # Installed Pallas does not accept pipeline_mode on BlockSpec (or
        # rejects Buffered(1)); fall back to default double-buffered weights.
        out = build(False)(*args)

    # (num_tiles, 1, TILE_B) -> (B, 1); any ragged-tail rows are dropped here.
    return out.reshape(-1)[:B].reshape(B, 1)


# ---------------------------------------------------------------------------
# Init / reference (for the self-test)
# ---------------------------------------------------------------------------
def init_params(key, in_feature, interm_size):
    """Deterministic init mirroring torch.nn.Linear default (U(-k,k), k=1/sqrt(fan_in))."""
    ks = jax.random.split(key, 6)

    def lin(kw, kb, fan_in, fan_out):
        bound = 1.0 / jnp.sqrt(jnp.float32(fan_in))
        w = jax.random.uniform(kw, (fan_out, fan_in), jnp.float32, -bound, bound)
        b = jax.random.uniform(kb, (fan_out,), jnp.float32, -bound, bound)
        return w, b

    w0, b0 = lin(ks[0], ks[1], in_feature, interm_size)
    w1, b1 = lin(ks[2], ks[3], interm_size, interm_size)
    w2, b2 = lin(ks[4], ks[5], interm_size, 1)
    return {"w0": w0, "b0": b0, "w1": w1, "b1": b1, "w2": w2, "b2": b2}


def reference_forward(language, visual, p):
    out = jnp.concatenate((language, visual), axis=1)
    out = jax.nn.relu(out @ p["w0"].T + p["b0"])
    out = jax.nn.relu(out @ p["w1"].T + p["b1"])
    return out @ p["w2"].T + p["b2"]


if __name__ == "__main__":
    # Small shapes consistent with the module (in_feature = Dl + Dv, interm_size = H)
    B, Dl, Dv, H = 8, 16, 48, 32

    key = jax.random.PRNGKey(0)
    k_lang, k_vis, k_params = jax.random.split(key, 3)
    language = jax.random.normal(k_lang, (B, Dl), jnp.float32)
    visual = jax.random.normal(k_vis, (B, Dv), jnp.float32)

    params = init_params(k_params, Dl + Dv, H)
    prepped = prepare_params(params, Dl)   # one-time weight split / transpose / cast

    out = global_discriminator(language, visual, prepped)
    out = jax.block_until_ready(out)

    ref = reference_forward(language, visual, params)
    assert out.shape == (B, 1), out.shape
    # bf16 MXU inputs with f32 accumulation -> tolerance ~1e-2 relative (intentional)
    assert jnp.allclose(out, ref, atol=2e-2, rtol=2e-2), (out, ref)
    print("KERNEL_OK")
</pallas_src>

<mosaic_0001>
module attributes {stable_mosaic.version = 11 : i64} {
  func.func @global_disc_kernel(%arg0: i32, %arg1: memref<8x16xf32, #tpu.memory_space<vmem>>, %arg2: memref<8x48xf32, #tpu.memory_space<vmem>>, %arg3: memref<16x32xbf16, #tpu.memory_space<vmem>>, %arg4: memref<48x32xbf16, #tpu.memory_space<vmem>>, %arg5: memref<1x32xf32, #tpu.memory_space<vmem>>, %arg6: memref<32x32xbf16, #tpu.memory_space<vmem>>, %arg7: memref<1x32xf32, #tpu.memory_space<vmem>>, %arg8: memref<8x32xf32, #tpu.memory_space<vmem>>, %arg9: memref<1x1xf32, #tpu.memory_space<smem>>, %arg10: memref<1x1x8xf32, #tpu.memory_space<vmem>>) attributes {dimension_semantics = [#tpu.dimension_semantics<parallel>], iteration_bounds = array<i64: 1>, scalar_prefetch = 0 : i64, scratch_operands = 0 : i64, tpu.core_type = #tpu.core_type<tc>, window_params = [{transform_indices = @transform_0, window_bounds = array<i64: 8, 16>}, {transform_indices = @transform_1, window_bounds = array<i64: 8, 48>}, {pipeline_mode = #tpu.pipeline_mode<synchronous>, transform_indices = @transform_2, window_bounds = array<i64: 16, 32>}, {pipeline_mode = #tpu.pipeline_mode<synchronous>, transform_indices = @transform_3, window_bounds = array<i64: 48, 32>}, {pipeline_mode = #tpu.pipeline_mode<synchronous>, transform_indices = @transform_4, window_bounds = array<i64: 1, 32>}, {pipeline_mode = #tpu.pipeline_mode<synchronous>, transform_indices = @transform_5, window_bounds = array<i64: 32, 32>}, {pipeline_mode = #tpu.pipeline_mode<synchronous>, transform_indices = @transform_6, window_bounds = array<i64: 1, 32>}, {pipeline_mode = #tpu.pipeline_mode<synchronous>, transform_indices = @transform_7, window_bounds = array<i64: 8, 32>}, {transform_indices = @transform_8, window_bounds = array<i64: 1, 1>}, {transform_indices = @transform_9, window_bounds = array<i64: 1, 1, 8>}]} {
    %c0 = arith.constant 0 : index
    %c0_0 = arith.constant 0 : index
    %0 = vector.load %arg1[%c0, %c0_0] : memref<8x16xf32, #tpu.memory_space<vmem>>, vector<8x16xf32>
    %1 = arith.truncf %0 : vector<8x16xf32> to vector<8x16xbf16>
    %c0_1 = arith.constant 0 : index
    %c0_2 = arith.constant 0 : index
    %2 = vector.load %arg2[%c0_1, %c0_2] : memref<8x48xf32, #tpu.memory_space<vmem>>, vector<8x48xf32>
    %3 = arith.truncf %2 : vector<8x48xf32> to vector<8x48xbf16>
    %c0_3 = arith.constant 0 : index
    %c0_4 = arith.constant 0 : index
    %4 = vector.load %arg3[%c0_3, %c0_4] : memref<16x32xbf16, #tpu.memory_space<vmem>>, vector<16x32xbf16>
    %cst = arith.constant dense<0.000000e+00> : vector<8x32xf32>
    %5 = tpu.matmul %1, %4, %cst {dimension_numbers = #tpu.dot_dimension_numbers<[1], [0], [0], [1], [0, 0, 1, 1], [], []>} : vector<8x16xbf16>, vector<16x32xbf16>, vector<8x32xf32> -> vector<8x32xf32>
    %c0_5 = arith.constant 0 : index
    %c0_6 = arith.constant 0 : index
    %6 = vector.load %arg4[%c0_5, %c0_6] : memref<48x32xbf16, #tpu.memory_space<vmem>>, vector<48x32xbf16>
    %cst_7 = arith.constant dense<0.000000e+00> : vector<8x32xf32>
    %7 = tpu.matmul %3, %6, %cst_7 {dimension_numbers = #tpu.dot_dimension_numbers<[1], [0], [0], [1], [0, 0, 1, 1], [], []>} : vector<8x48xbf16>, vector<48x32xbf16>, vector<8x32xf32> -> vector<8x32xf32>
    %8 = arith.addf %5, %7 : vector<8x32xf32>
    %c0_8 = arith.constant 0 : index
    %c0_9 = arith.constant 0 : index
    %9 = vector.load %arg5[%c0_8, %c0_9] : memref<1x32xf32, #tpu.memory_space<vmem>>, vector<1x32xf32>
    %10 = vector.broadcast %9 : vector<1x32xf32> to vector<8x32xf32>
    %11 = arith.addf %8, %10 : vector<8x32xf32>
    %cst_10 = arith.constant 0.000000e+00 : f32
    %12 = vector.broadcast %cst_10 : f32 to vector<8x32xf32>
    %13 = arith.maximumf %11, %12 : vector<8x32xf32>
    %14 = arith.truncf %13 : vector<8x32xf32> to vector<8x32xbf16>
    %c0_11 = arith.constant 0 : index
    %c0_12 = arith.constant 0 : index
    %15 = vector.load %arg6[%c0_11, %c0_12] : memref<32x32xbf16, #tpu.memory_space<vmem>>, vector<32x32xbf16>
    %cst_13 = arith.constant dense<0.000000e+00> : vector<8x32xf32>
    %16 = tpu.matmul %14, %15, %cst_13 {dimension_numbers = #tpu.dot_dimension_numbers<[1], [0], [0], [1], [0, 0, 1, 1], [], []>} : vector<8x32xbf16>, vector<32x32xbf16>, vector<8x32xf32> -> vector<8x32xf32>
    %c0_14 = arith.constant 0 : index
    %c0_15 = arith.constant 0 : index
    %17 = vector.load %arg7[%c0_14, %c0_15] : memref<1x32xf32, #tpu.memory_space<vmem>>, vector<1x32xf32>
    %18 = vector.broadcast %17 : vector<1x32xf32> to vector<8x32xf32>
    %19 = arith.addf %16, %18 : vector<8x32xf32>
    %cst_16 = arith.constant 0.000000e+00 : f32
    %20 = vector.broadcast %cst_16 : f32 to vector<8x32xf32>
    %21 = arith.maximumf %19, %20 : vector<8x32xf32>
    %c0_17 = arith.constant 0 : index
    %c0_18 = arith.constant 0 : index
    %22 = vector.load %arg8[%c0_17, %c0_18] : memref<8x32xf32, #tpu.memory_space<vmem>>, vector<8x32xf32>
    %cst_19 = arith.constant dense<0.000000e+00> : vector<8x8xf32>
    %23 = tpu.matmul %22, %21, %cst_19 {dimension_numbers = #tpu.dot_dimension_numbers<[1], [1], [0], [0], [0, 0, 1, 0], [], []>} : vector<8x32xf32>, vector<8x32xf32>, vector<8x8xf32> -> vector<8x8xf32>
    %24 = vector.extract_strided_slice %23 {offsets = [0, 0], sizes = [1, 8], strides = [1, 1]} : vector<8x8xf32> to vector<1x8xf32>
    %c0_20 = arith.constant 0 : index
    %c0_21 = arith.constant 0 : index
    %25 = memref.load %arg9[%c0_20, %c0_21] : memref<1x1xf32, #tpu.memory_space<smem>>
    %26 = vector.broadcast %25 : f32 to vector<1x8xf32>
    %27 = arith.addf %24, %26 : vector<1x8xf32>
    %28 = vector.shape_cast %27 : vector<1x8xf32> to vector<1x1x8xf32>
    %c0_22 = arith.constant 0 : index
    %c0_23 = arith.constant 0 : index
    %c0_24 = arith.constant 0 : index
    %29 = vector.load %arg10[%c0_22, %c0_23, %c0_24] : memref<1x1x8xf32, #tpu.memory_space<vmem>>, vector<1x1x8xf32>
    tpu.vector_store %arg10[%c0_22, %c0_23, %c0_24], %28 {strides = array<i32>} : memref<1x1x8xf32, #tpu.memory_space<vmem>>, vector<1x1x8xf32>,
    return
  }
  func.func @transform_0(%arg0: i32) -> (i32, i32) {
    %c0_i32 = arith.constant 0 : i32
    %c0_i32_0 = arith.constant 0 : i32
    return %arg0, %c0_i32 : i32, i32
  }
  func.func @transform_1(%arg0: i32) -> (i32, i32) {
    %c0_i32 = arith.constant 0 : i32
    %c0_i32_0 = arith.constant 0 : i32
    return %arg0, %c0_i32 : i32, i32
  }
  func.func @transform_2(%arg0: i32) -> (i32, i32) {
    %c0_i32 = arith.constant 0 : i32
    %c0_i32_0 = arith.constant 0 : i32
    %c0_i32_1 = arith.constant 0 : i32
    return %c0_i32, %c0_i32_0 : i32, i32
  }
  func.func @transform_3(%arg0: i32) -> (i32, i32) {
    %c0_i32 = arith.constant 0 : i32
    %c0_i32_0 = arith.constant 0 : i32
    %c0_i32_1 = arith.constant 0 : i32
    return %c0_i32, %c0_i32_0 : i32, i32
  }
  func.func @transform_4(%arg0: i32) -> (i32, i32) {
    %c0_i32 = arith.constant 0 : i32
    %c0_i32_0 = arith.constant 0 : i32
    %c0_i32_1 = arith.constant 0 : i32
    return %c0_i32, %c0_i32_0 : i32, i32
  }
  func.func @transform_5(%arg0: i32) -> (i32, i32) {
    %c0_i32 = arith.constant 0 : i32
    %c0_i32_0 = arith.constant 0 : i32
    %c0_i32_1 = arith.constant 0 : i32
    return %c0_i32, %c0_i32_0 : i32, i32
  }
  func.func @transform_6(%arg0: i32) -> (i32, i32) {
    %c0_i32 = arith.constant 0 : i32
    %c0_i32_0 = arith.constant 0 : i32
    %c0_i32_1 = arith.constant 0 : i32
    return %c0_i32, %c0_i32_0 : i32, i32
  }
  func.func @transform_7(%arg0: i32) -> (i32, i32) {
    %c0_i32 = arith.constant 0 : i32
    %c0_i32_0 = arith.constant 0 : i32
    %c0_i32_1 = arith.constant 0 : i32
    return %c0_i32, %c0_i32_0 : i32, i32
  }
  func.func @transform_8(%arg0: i32) -> (i32, i32) {
    %c0_i32 = arith.constant 0 : i32
    %c0_i32_0 = arith.constant 0 : i32
    %c0_i32_1 = arith.constant 0 : i32
    return %c0_i32, %c0_i32_0 : i32, i32
  }
  func.func @transform_9(%arg0: i32) -> (i32, i32, i32) {
    %c0_i32 = arith.constant 0 : i32
    %c0_i32_0 = arith.constant 0 : i32
    %c0_i32_1 = arith.constant 0 : i32
    return %arg0, %c0_i32, %c0_i32_0 : i32, i32, i32
  }
}

module attributes {stable_mosaic.version = 11 : i64} {
  func.func @global_disc_kernel(%arg0: i32, %arg1: memref<8x16xf32, #tpu.memory_space<vmem>>, %arg2: memref<8x48xf32, #tpu.memory_space<vmem>>, %arg3: memref<16x32xbf16, #tpu.memory_space<vmem>>, %arg4: memref<48x32xbf16, #tpu.memory_space<vmem>>, %arg5: memref<1x32xf32, #tpu.memory_space<vmem>>, %arg6: memref<32x32xbf16, #tpu.memory_space<vmem>>, %arg7: memref<1x32xf32, #tpu.memory_space<vmem>>, %arg8: memref<8x32xf32, #tpu.memory_space<vmem>>, %arg9: memref<1x1xf32, #tpu.memory_space<smem>>, %arg10: memref<1x1x8xf32, #tpu.memory_space<vmem>>) attributes {dimension_semantics = [#tpu.dimension_semantics<parallel>], iteration_bounds = array<i64: 1>, scalar_prefetch = 0 : i64, scratch_operands = 0 : i64, tpu.core_type = #tpu.core_type<tc>, window_params = [{transform_indices = @transform_0, window_bounds = array<i64: 8, 16>}, {transform_indices = @transform_1, window_bounds = array<i64: 8, 48>}, {pipeline_mode = #tpu.pipeline_mode<synchronous>, transform_indices = @transform_2, window_bounds = array<i64: 16, 32>}, {pipeline_mode = #tpu.pipeline_mode<synchronous>, transform_indices = @transform_3, window_bounds = array<i64: 48, 32>}, {pipeline_mode = #tpu.pipeline_mode<synchronous>, transform_indices = @transform_4, window_bounds = array<i64: 1, 32>}, {pipeline_mode = #tpu.pipeline_mode<synchronous>, transform_indices = @transform_5, window_bounds = array<i64: 32, 32>}, {pipeline_mode = #tpu.pipeline_mode<synchronous>, transform_indices = @transform_6, window_bounds = array<i64: 1, 32>}, {pipeline_mode = #tpu.pipeline_mode<synchronous>, transform_indices = @transform_7, window_bounds = array<i64: 8, 32>}, {transform_indices = @transform_8, window_bounds = array<i64: 1, 1>}, {transform_indices = @transform_9, window_bounds = array<i64: 1, 1, 8>}]} {
    %c0 = arith.constant 0 : index
    %c0_0 = arith.constant 0 : index
    %0 = vector.load %arg1[%c0, %c0_0] : memref<8x16xf32, #tpu.memory_space<vmem>>, vector<8x16xf32>
    %1 = arith.truncf %0 : vector<8x16xf32> to vector<8x16xbf16>
    %c0_1 = arith.constant 0 : index
    %c0_2 = arith.constant 0 : index
    %2 = vector.load %arg2[%c0_1, %c0_2] : memref<8x48xf32, #tpu.memory_space<vmem>>, vector<8x48xf32>
    %3 = arith.truncf %2 : vector<8x48xf32> to vector<8x48xbf16>
    %c0_3 = arith.constant 0 : index
    %c0_4 = arith.constant 0 : index
    %4 = vector.load %arg3[%c0_3, %c0_4] : memref<16x32xbf16, #tpu.memory_space<vmem>>, vector<16x32xbf16>
    %cst = arith.constant dense<0.000000e+00> : vector<8x32xf32>
    %5 = tpu.matmul %1, %4, %cst {dimension_numbers = #tpu.dot_dimension_numbers<[1], [0], [0], [1], [0, 0, 1, 1], [], []>} : vector<8x16xbf16>, vector<16x32xbf16>, vector<8x32xf32> -> vector<8x32xf32>
    %c0_5 = arith.constant 0 : index
    %c0_6 = arith.constant 0 : index
    %6 = vector.load %arg4[%c0_5, %c0_6] : memref<48x32xbf16, #tpu.memory_space<vmem>>, vector<48x32xbf16>
    %cst_7 = arith.constant dense<0.000000e+00> : vector<8x32xf32>
    %7 = tpu.matmul %3, %6, %cst_7 {dimension_numbers = #tpu.dot_dimension_numbers<[1], [0], [0], [1], [0, 0, 1, 1], [], []>} : vector<8x48xbf16>, vector<48x32xbf16>, vector<8x32xf32> -> vector<8x32xf32>
    %8 = arith.addf %5, %7 : vector<8x32xf32>
    %c0_8 = arith.constant 0 : index
    %c0_9 = arith.constant 0 : index
    %9 = vector.load %arg5[%c0_8, %c0_9] : memref<1x32xf32, #tpu.memory_space<vmem>>, vector<1x32xf32>
    %10 = vector.broadcast %9 : vector<1x32xf32> to vector<8x32xf32>
    %11 = arith.addf %8, %10 : vector<8x32xf32>
    %cst_10 = arith.constant 0.000000e+00 : f32
    %12 = vector.broadcast %cst_10 : f32 to vector<8x32xf32>
    %13 = arith.maximumf %11, %12 : vector<8x32xf32>
    %14 = arith.truncf %13 : vector<8x32xf32> to vector<8x32xbf16>
    %c0_11 = arith.constant 0 : index
    %c0_12 = arith.constant 0 : index
    %15 = vector.load %arg6[%c0_11, %c0_12] : memref<32x32xbf16, #tpu.memory_space<vmem>>, vector<32x32xbf16>
    %cst_13 = arith.constant dense<0.000000e+00> : vector<8x32xf32>
    %16 = tpu.matmul %14, %15, %cst_13 {dimension_numbers = #tpu.dot_dimension_numbers<[1], [0], [0], [1], [0, 0, 1, 1], [], []>} : vector<8x32xbf16>, vector<32x32xbf16>, vector<8x32xf32> -> vector<8x32xf32>
    %c0_14 = arith.constant 0 : index
    %c0_15 = arith.constant 0 : index
    %17 = vector.load %arg7[%c0_14, %c0_15] : memref<1x32xf32, #tpu.memory_space<vmem>>, vector<1x32xf32>
    %18 = vector.broadcast %17 : vector<1x32xf32> to vector<8x32xf32>
    %19 = arith.addf %16, %18 : vector<8x32xf32>
    %cst_16 = arith.constant 0.000000e+00 : f32
    %20 = vector.broadcast %cst_16 : f32 to vector<8x32xf32>
    %21 = arith.maximumf %19, %20 : vector<8x32xf32>
    %c0_17 = arith.constant 0 : index
    %c0_18 = arith.constant 0 : index
    %22 = vector.load %arg8[%c0_17, %c0_18] : memref<8x32xf32, #tpu.memory_space<vmem>>, vector<8x32xf32>
    %cst_19 = arith.constant dense<0.000000e+00> : vector<8x8xf32>
    %23 = tpu.matmul %22, %21, %cst_19 {dimension_numbers = #tpu.dot_dimension_numbers<[1], [1], [0], [0], [0, 0, 1, 0], [], []>} : vector<8x32xf32>, vector<8x32xf32>, vector<8x8xf32> -> vector<8x8xf32>
    %24 = vector.extract_strided_slice %23 {offsets = [0, 0], sizes = [1, 8], strides = [1, 1]} : vector<8x8xf32> to vector<1x8xf32>
    %c0_20 = arith.constant 0 : index
    %c0_21 = arith.constant 0 : index
    %25 = memref.load %arg9[%c0_20, %c0_21] : memref<1x1xf32, #tpu.memory_space<smem>>
    %26 = vector.broadcast %25 : f32 to vector<1x8xf32>
    %27 = arith.addf %24, %26 : vector<1x8xf32>
    %28 = vector.shape_cast %27 : vector<1x8xf32> to vector<1x1x8xf32>
    %c0_22 = arith.constant 0 : index
    %c0_23 = arith.constant 0 : index
    %c0_24 = arith.constant 0 : index
    %29 = vector.load %arg10[%c0_22, %c0_23, %c0_24] : memref<1x1x8xf32, #tpu.memory_space<vmem>>, vector<1x1x8xf32>
    tpu.vector_store %arg10[%c0_22, %c0_23, %c0_24], %28 {strides = array<i32>} : memref<1x1x8xf32, #tpu.memory_space<vmem>>, vector<1x1x8xf32>,
    return
  }
  func.func @transform_0(%arg0: i32) -> (i32, i32) {
    %c0_i32 = arith.constant 0 : i32
    %c0_i32_0 = arith.constant 0 : i32
    return %arg0, %c0_i32 : i32, i32
  }
  func.func @transform_1(%arg0: i32) -> (i32, i32) {
    %c0_i32 = arith.constant 0 : i32
    %c0_i32_0 = arith.constant 0 : i32
    return %arg0, %c0_i32 : i32, i32
  }
  func.func @transform_2(%arg0: i32) -> (i32, i32) {
    %c0_i32 = arith.constant 0 : i32
    %c0_i32_0 = arith.constant 0 : i32
    %c0_i32_1 = arith.constant 0 : i32
    return %c0_i32, %c0_i32_0 : i32, i32
  }
  func.func @transform_3(%arg0: i32) -> (i32, i32) {
    %c0_i32 = arith.constant 0 : i32
    %c0_i32_0 = arith.constant 0 : i32
    %c0_i32_1 = arith.constant 0 : i32
    return %c0_i32, %c0_i32_0 : i32, i32
  }
  func.func @transform_4(%arg0: i32) -> (i32, i32) {
    %c0_i32 = arith.constant 0 : i32
    %c0_i32_0 = arith.constant 0 : i32
    %c0_i32_1 = arith.constant 0 : i32
    return %c0_i32, %c0_i32_0 : i32, i32
  }
  func.func @transform_5(%arg0: i32) -> (i32, i32) {
    %c0_i32 = arith.constant 0 : i32
    %c0_i32_0 = arith.constant 0 : i32
    %c0_i32_1 = arith.constant 0 : i32
    return %c0_i32, %c0_i32_0 : i32, i32
  }
  func.func @transform_6(%arg0: i32) -> (i32, i32) {
    %c0_i32 = arith.constant 0 : i32
    %c0_i32_0 = arith.constant 0 : i32
    %c0_i32_1 = arith.constant 0 : i32
    return %c0_i32, %c0_i32_0 : i32, i32
  }
  func.func @transform_7(%arg0: i32) -> (i32, i32) {
    %c0_i32 = arith.constant 0 : i32
    %c0_i32_0 = arith.constant 0 : i32
    %c0_i32_1 = arith.constant 0 : i32
    return %c0_i32, %c0_i32_0 : i32, i32
  }
  func.func @transform_8(%arg0: i32) -> (i32, i32) {
    %c0_i32 = arith.constant 0 : i32
    %c0_i32_0 = arith.constant 0 : i32
    %c0_i32_1 = arith.constant 0 : i32
    return %c0_i32, %c0_i32_0 : i32, i32
  }
  func.func @transform_9(%arg0: i32) -> (i32, i32, i32) {
    %c0_i32 = arith.constant 0 : i32
    %c0_i32_0 = arith.constant 0 : i32
    %c0_i32_1 = arith.constant 0 : i32
    return %arg0, %c0_i32, %c0_i32_0 : i32, i32, i32
  }
}

</mosaic_0001>

<llo_original>
// kernel: tpu_custom_call.1
$region0: #{tpu_custom_call.1}
  #allocation0 [shape = 'u32[]', space=smem, size = 0x4, offset = 0x4, fixed_abs, tag = 'smem constant byte address 0x4 - core index']
  #allocation1 [shape = 'u32[144,128]{1,0:T(1,128)}', space=vmem, size = 0x12000, scoped, tag = 'internal scratch']
  #allocation2 [shape = 'f32[1,1]{1,0:T(1,128)S(6)}', space=smem, size = 0x200, scoped, tag = 'scoped memory for tpu_custom_call.1']
  %s0 = inlined_call_operand.vmem [shape: f32[8,16], index: 0, kind: input, shape index: {}]
  %s1 = inlined_call_operand.vmem [shape: f32[8,48], index: 1, kind: input, shape index: {}]
  %s2 = inlined_call_operand.vmem [shape: bf16[16,32], index: 2, kind: input, shape index: {}]
  %s3 = inlined_call_operand.vmem [shape: bf16[48,32], index: 3, kind: input, shape index: {}]
  %s4 = inlined_call_operand.vmem [shape: f32[1,32], index: 4, kind: input, shape index: {}]
  %s5 = inlined_call_operand.vmem [shape: bf16[32,32], index: 5, kind: input, shape index: {}]
  %s6 = inlined_call_operand.vmem [shape: f32[1,32], index: 6, kind: input, shape index: {}]
  %s7 = inlined_call_operand.vmem [shape: f32[8,32], index: 7, kind: input, shape index: {}]
  %s8 = inlined_call_operand.<no memory space> [shape: f32[1,1], index: 8, kind: input, shape index: {}]
  %s9 = inlined_call_operand.hbm [shape: f32[1,1,8], index: 9, kind: output, shape index: {}]
  %s10 = sld [smem:[#allocation0]]
  $region46: #{tpu_custom_call.1} parent=0
    _
  %s12 = ssub.s32 1, %s10
  %s13 = scalar_select 0, %s12, %s10
  %14 = sst [smem:[#allocation2]] %s8
  $region1: #{tpu_custom_call.1} parent=0
    #allocation3 [shape = 'u8[512]{0}', space=vmem, size = 0x400, scoped, tag = 'output window, operand 0, single buffered']
    #allocation4 [shape = 's32[1]{0}', space=sflag, size = 0x4, scoped, tag = 'scoped memory for tpu_custom_call.1']
    %15 = vsyncpa [#allocation4], 0
    // Predicated region
    $region2: #{tpu_custom_call.1} parent=1 // pred_check
      _
    $region3: #{tpu_custom_call.1} parent=1 // pred_check_branch
      %17 = sbr.rel (0) target = $region5
    $region4: #{tpu_custom_call.1} parent=1 // pred_region
      _
    $region5: #{tpu_custom_call.1} parent=1 // pred_fallthru
      _
    // Predicated region
    $region6: #{tpu_custom_call.1} parent=1 // pred_check
      _
    $region7: #{tpu_custom_call.1} parent=1 // pred_check_branch
      %19 = sbr.rel (0) target = $region9
    $region8: #{tpu_custom_call.1} parent=1 // pred_region
      _
    $region9: #{tpu_custom_call.1} parent=1 // pred_fallthru
      _
    // Predicated region
    $region10: #{tpu_custom_call.1} parent=1 // pred_check
      _
    $region11: #{tpu_custom_call.1} parent=1 // pred_check_branch
      %21 = sbr.rel (0) target = $region13
    $region12: #{tpu_custom_call.1} parent=1 // pred_region
      _
    $region13: #{tpu_custom_call.1} parent=1 // pred_fallthru
      _
    // Predicated region
    $region14: #{tpu_custom_call.1} parent=1 // pred_check
      _
    $region15: #{tpu_custom_call.1} parent=1 // pred_check_branch
      %23 = sbr.rel (0) target = $region17
    $region16: #{tpu_custom_call.1} parent=1 // pred_region
      _
    $region17: #{tpu_custom_call.1} parent=1 // pred_fallthru
      _
    // Predicated region
    $region18: #{tpu_custom_call.1} parent=1 // pred_check
      _
    $region19: #{tpu_custom_call.1} parent=1 // pred_check_branch
      %25 = sbr.rel (0) target = $region21
    $region20: #{tpu_custom_call.1} parent=1 // pred_region
      _
    $region21: #{tpu_custom_call.1} parent=1 // pred_fallthru
      _
    // Predicated region
    $region22: #{tpu_custom_call.1} parent=1 // pred_check
      _
    $region23: #{tpu_custom_call.1} parent=1 // pred_check_branch
      %27 = sbr.rel (0) target = $region25
    $region24: #{tpu_custom_call.1} parent=1 // pred_region
      _
    $region25: #{tpu_custom_call.1} parent=1 // pred_fallthru
      _
    // Predicated region
    $region26: #{tpu_custom_call.1} parent=1 // pred_check
      _
    $region27: #{tpu_custom_call.1} parent=1 // pred_check_branch
      %29 = sbr.rel (0) target = $region29
    $region28: #{tpu_custom_call.1} parent=1 // pred_region
      _
    $region29: #{tpu_custom_call.1} parent=1 // pred_fallthru
      _
    // Predicated region
    $region30: #{tpu_custom_call.1} parent=1 // pred_check
      _
    $region31: #{tpu_custom_call.1} parent=1 // pred_check_branch
      %31 = sbr.rel (0) target = $region33
    $region32: #{tpu_custom_call.1} parent=1 // pred_region
      _
    $region33: #{tpu_custom_call.1} parent=1 // pred_fallthru
      _
    // Predicated region
    $region34: #{tpu_custom_call.1} parent=1 // pred_check
      _
    $region35: #{tpu_custom_call.1} parent=1 // pred_check_branch
      %33 = sbr.rel (0) target = $region37
    $region36: #{tpu_custom_call.1} parent=1 // pred_region
      _
    $region37: #{tpu_custom_call.1} parent=1 // pred_fallthru
      _
    %v35 = vld [vmem:[%s0] sm:$0xff]
    %v36 = vpack.c.bf16 %v35, %v35
    %v37 = vld [vmem:[%s1] sm:$0xff]
    %v38 = vpack.c.bf16 %v37, %v37
    %v39 = vld [vmem:[%s2] sm:$0xf]
    %v40 = vld [vmem:[%s2 + $0x4] sm:$0xf]
    %v41 = vld [vmem:[%s3] sm:$0xf]
    %v42 = vld [vmem:[%s3 + $0x4] sm:$0xf]
    %v43 = vld [vmem:[%s3 + $0x8] sm:$0xf]
    %v44 = vld [vmem:[%s3 + $0xc] sm:$0xf]
    %v45 = vld [vmem:[%s3 + $0x10] sm:$0xf]
    %v46 = vld [vmem:[%s3 + $0x14] sm:$0xf]
    %v53 = vunpack.c.l.b16 %v41
    %v54 = vunpack.c.l.b16 %v42
    %v55 = vunpack.c.l.b16 %v43
    %v56 = vunpack.c.l.b16 %v44
    %v57 = vunpack.c.l.b16 %v45
    %v58 = vunpack.c.l.b16 %v46
    %v59 = vpack.c.b16 %v54, %v53
    %v60 = vpack.c.b16 %v56, %v55
    %v61 = vpack.c.b16 %v58, %v57
    %vm65 = vcmask 392192
    %v67 = vsel %vm65, %v38, 0
    %69 = vmatprep.subr.bf16.mxu0 0
    %70 = vmatpush1.bf16.msra.mxu0 %v59
    %71 = vmatprep.subr.bf16.mxu0 0
    %72 = vmatpush1.bf16.msra.mxu0 %v60
    %73 = vmatprep.subr.bf16.mxu0 0
    %74 = vmatpush1.bf16.msra.mxu0 %v61
    %75 = vmatprep.subr.bf16.mxu0 0
    %76 = vmatpush1.bf16.msra.mxu0 0
    %77 = vmatprep.subr.bf16.mxu0 0
    %78 = vmatpush1.bf16.msra.mxu0 0
    %79 = vmatprep.subr.bf16.mxu0 0
    %80 = vmatpush1.bf16.msra.mxu0 0
    %81 = vmatprep.subr.bf16.mxu0 0
    %82 = vmatpush1.bf16.msra.mxu0 0
    %83 = vmatprep.subr.bf16.mxu0 0
    %84 = vmatpush1.bf16.msra.mxu0 0
    %85 = vmatprep.subr.bf16.mxu0 0
    %86 = vmatpush1.bf16.msra.mxu0 0
    %87 = vmatprep.subr.bf16.mxu0 0
    %88 = vmatpush1.bf16.msra.mxu0 0
    %89 = vmatprep.subr.bf16.mxu0 0
    %90 = vmatpush1.bf16.msra.mxu0 0
    %91 = vmatprep.subr.bf16.mxu0 0
    %92 = vmatpush1.bf16.msra.mxu0 0
    %93 = vmatprep.subr.bf16.mxu0 0
    %94 = vmatpush1.bf16.msra.mxu0 0
    %95 = vmatprep.subr.bf16.mxu0 0
    %96 = vmatpush1.bf16.msra.mxu0 0
    %97 = vmatprep.subr.bf16.mxu0 0
    %98 = vmatpush1.bf16.msra.mxu0 0
    %99 = vmatprep.subr.bf16.mxu0 0
    %100 = vmatpush1.bf16.msra.mxu0 0
    %101 = vmatprep.mubr.bf16.mxu0 0
    %102 = vmatmul.mubr.bf16.gmra.mrb[0].mxu0 %v67
    %v103 = vpop.f32.mrb[0].mxu0
    %v104 = vadd.f32 0.0, %v103
    %v105 = vpop.f32.mrb[0].mxu0
    %v106 = vpop.f32.mrb[0].mxu0
    %v107 = vpop.f32.mrb[0].mxu0
    %108 = vdwg.mxu0
    %v111 = vunpack.c.l.b16 %v39
    %v112 = vunpack.c.l.b16 %v40
    %v113 = vpack.c.b16 %v112, %v111
    %vm115 = vcmask 130048
    %v117 = vsel %vm115, %v36, 0
    %119 = vmatprep.subr.bf16.mxu0 0
    %120 = vmatpush1.bf16.msra.mxu0 %v113
    %121 = vmatprep.subr.bf16.mxu0 0
    %122 = vmatpush1.bf16.msra.mxu0 0
    %123 = vmatprep.subr.bf16.mxu0 0
    %124 = vmatpush1.bf16.msra.mxu0 0
    %125 = vmatprep.subr.bf16.mxu0 0
    %126 = vmatpush1.bf16.msra.mxu0 0
    %127 = vmatprep.subr.bf16.mxu0 0
    %128 = vmatpush1.bf16.msra.mxu0 0
    %129 = vmatprep.subr.bf16.mxu0 0
    %130 = vmatpush1.bf16.msra.mxu0 0
    %131 = vmatprep.subr.bf16.mxu0 0
    %132 = vmatpush1.bf16.msra.mxu0 0
    %133 = vmatprep.subr.bf16.mxu0 0
    %134 = vmatpush1.bf16.msra.mxu0 0
    %135 = vmatprep.subr.bf16.mxu0 0
    %136 = vmatpush1.bf16.msra.mxu0 0
    %137 = vmatprep.subr.bf16.mxu0 0
    %138 = vmatpush1.bf16.msra.mxu0 0
    %139 = vmatprep.subr.bf16.mxu0 0
    %140 = vmatpush1.bf16.msra.mxu0 0
    %141 = vmatprep.subr.bf16.mxu0 0
    %142 = vmatpush1.bf16.msra.mxu0 0
    %143 = vmatprep.subr.bf16.mxu0 0
    %144 = vmatpush1.bf16.msra.mxu0 0
    %145 = vmatprep.subr.bf16.mxu0 0
    %146 = vmatpush1.bf16.msra.mxu0 0
    %147 = vmatprep.subr.bf16.mxu0 0
    %148 = vmatpush1.bf16.msra.mxu0 0
    %149 = vmatprep.subr.bf16.mxu0 0
    %150 = vmatpush1.bf16.msra.mxu0 0
    %151 = vmatprep.mubr.bf16.mxu0 0
    %152 = vmatmul.mubr.bf16.gmra.mrb[0].mxu0 %v117
    %v153 = vpop.f32.mrb[0].mxu0
    %v154 = vadd.f32 %v104, %v153
    %v155 = vpop.f32.mrb[0].mxu0
    %v156 = vpop.f32.mrb[0].mxu0
    %v157 = vpop.f32.mrb[0].mxu0
    %158 = vdwg.mxu0
    %v159 = vld [vmem:[%s4] sm:$0x1]
    %v161 = vlaneseq
    %v162 = vshrl.u32 %v161, 7
    %v163 = vsub.s32 0, %v162
    %v164 = vrot.slane %v159, %v163
    %v166 = vadd.f32 %v154, %v164
    %v167 = vmax.f32 %v166, 0.0
    %v168 = vpack.c.bf16 %v167, %v167
    %v169 = vld [vmem:[%s5] sm:$0xf]
    %v170 = vld [vmem:[%s5 + $0x4] sm:$0xf]
    %v171 = vld [vmem:[%s5 + $0x8] sm:$0xf]
    %v172 = vld [vmem:[%s5 + $0xc] sm:$0xf]
    %v173 = vld [vmem:[%s6] sm:$0x1]
    %v175 = vlaneseq
    %v176 = vshrl.u32 %v175, 7
    %v177 = vsub.s32 0, %v176
    %v178 = vrot.slane %v173, %v177
    %v184 = vunpack.c.l.b16 %v169
    %v185 = vunpack.c.l.b16 %v170
    %v186 = vunpack.c.l.b16 %v171
    %v187 = vunpack.c.l.b16 %v172
    %v188 = vpack.c.b16 %v185, %v184
    %v189 = vpack.c.b16 %v187, %v186
    %vm192 = vcmask 261120
    %v194 = vsel %vm192, %v168, 0
    %196 = vmatprep.subr.bf16.mxu0 0
    %197 = vmatpush1.bf16.msra.mxu0 %v188
    %198 = vmatprep.subr.bf16.mxu0 0
    %199 = vmatpush1.bf16.msra.mxu0 %v189
    %200 = vmatprep.subr.bf16.mxu0 0
    %201 = vmatpush1.bf16.msra.mxu0 0
    %202 = vmatprep.subr.bf16.mxu0 0
    %203 = vmatpush1.bf16.msra.mxu0 0
    %204 = vmatprep.subr.bf16.mxu0 0
    %205 = vmatpush1.bf16.msra.mxu0 0
    %206 = vmatprep.subr.bf16.mxu0 0
    %207 = vmatpush1.bf16.msra.mxu0 0
    %208 = vmatprep.subr.bf16.mxu0 0
    %209 = vmatpush1.bf16.msra.mxu0 0
    %210 = vmatprep.subr.bf16.mxu0 0
    %211 = vmatpush1.bf16.msra.mxu0 0
    %212 = vmatprep.subr.bf16.mxu0 0
    %213 = vmatpush1.bf16.msra.mxu0 0
    %214 = vmatprep.subr.bf16.mxu0 0
    %215 = vmatpush1.bf16.msra.mxu0 0
    %216 = vmatprep.subr.bf16.mxu0 0
    %217 = vmatpush1.bf16.msra.mxu0 0
    %218 = vmatprep.subr.bf16.mxu0 0
    %219 = vmatpush1.bf16.msra.mxu0 0
    %220 = vmatprep.subr.bf16.mxu0 0
    %221 = vmatpush1.bf16.msra.mxu0 0
    %222 = vmatprep.subr.bf16.mxu0 0
    %223 = vmatpush1.bf16.msra.mxu0 0
    %224 = vmatprep.subr.bf16.mxu0 0
    %225 = vmatpush1.bf16.msra.mxu0 0
    %226 = vmatprep.subr.bf16.mxu0 0
    %227 = vmatpush1.bf16.msra.mxu0 0
    %228 = vmatprep.mubr.bf16.mxu0 0
    %229 = vmatmul.mubr.bf16.gmra.mrb[0].mxu0 %v194
    %v230 = vpop.f32.mrb[0].mxu0
    %v231 = vadd.f32 %v178, %v230
    %v232 = vpop.f32.mrb[0].mxu0
    %v233 = vpop.f32.mrb[0].mxu0
    %v234 = vpop.f32.mrb[0].mxu0
    %235 = vdwg.mxu0
    %v236 = vmax.f32 %v231, 0.0
    %v237 = vld [vmem:[%s7] sm:$0xff]
    %v239 = vsel %vm192, %v237, 0
    %v242 = vsel %vm192, %v236, 0
    %244 = vmatprep.subr.mxu0 0.0
    %245 = vmatpush1.xpose.msra.mxu0 %v242
    %246 = vmatprep.subr.mxu0 0.0
    %247 = vmatpush1.xpose.msra.mxu0 0.0
    %248 = vmatprep.subr.mxu0 0.0
    %249 = vmatpush1.xpose.msra.mxu0 0.0
    %250 = vmatprep.subr.mxu0 0.0
    %251 = vmatpush1.xpose.msra.mxu0 0.0
    %252 = vmatprep.subr.mxu0 0.0
    %253 = vmatpush1.xpose.msra.mxu0 0.0
    %254 = vmatprep.subr.mxu0 0.0
    %255 = vmatpush1.xpose.msra.mxu0 0.0
    %256 = vmatprep.subr.mxu0 0.0
    %257 = vmatpush1.xpose.msra.mxu0 0.0
    %258 = vmatprep.subr.mxu0 0.0
    %259 = vmatpush1.xpose.msra.mxu0 0.0
    %260 = vmatprep.subr.mxu0 0.0
    %261 = vmatpush1.xpose.msra.mxu0 0.0
    %262 = vmatprep.subr.mxu0 0.0
    %263 = vmatpush1.xpose.msra.mxu0 0.0
    %264 = vmatprep.subr.mxu0 0.0
    %265 = vmatpush1.xpose.msra.mxu0 0.0
    %266 = vmatprep.subr.mxu0 0.0
    %267 = vmatpush1.xpose.msra.mxu0 0.0
    %268 = vmatprep.subr.mxu0 0.0
    %269 = vmatpush1.xpose.msra.mxu0 0.0
    %270 = vmatprep.subr.mxu0 0.0
    %271 = vmatpush1.xpose.msra.mxu0 0.0
    %272 = vmatprep.subr.mxu0 0.0
    %273 = vmatpush1.xpose.msra.mxu0 0.0
    %274 = vmatprep.subr.mxu0 0.0
    %275 = vmatpush1.xpose.msra.mxu0 0.0
    %276 = vmatprep.subr.mxu0 0.0
    %277 = vmatpush1.xpose.msra.mxu0 0.0
    %278 = vmatprep.subr.mxu0 0.0
    %279 = vmatpush1.xpose.msra.mxu0 0.0
    %280 = vmatprep.subr.mxu0 0.0
    %281 = vmatpush1.xpose.msra.mxu0 0.0
    %282 = vmatprep.subr.mxu0 0.0
    %283 = vmatpush1.xpose.msra.mxu0 0.0
    %284 = vmatprep.subr.mxu0 0.0
    %285 = vmatpush1.xpose.msra.mxu0 0.0
    %286 = vmatprep.subr.mxu0 0.0
    %287 = vmatpush1.xpose.msra.mxu0 0.0
    %288 = vmatprep.subr.mxu0 0.0
    %289 = vmatpush1.xpose.msra.mxu0 0.0
    %290 = vmatprep.subr.mxu0 0.0
    %291 = vmatpush1.xpose.msra.mxu0 0.0
    %292 = vmatprep.subr.mxu0 0.0
    %293 = vmatpush1.xpose.msra.mxu0 0.0
    %294 = vmatprep.subr.mxu0 0.0
    %295 = vmatpush1.xpose.msra.mxu0 0.0
    %296 = vmatprep.subr.mxu0 0.0
    %297 = vmatpush1.xpose.msra.mxu0 0.0
    %298 = vmatprep.subr.mxu0 0.0
    %299 = vmatpush1.xpose.msra.mxu0 0.0
    %300 = vmatprep.subr.mxu0 0.0
    %301 = vmatpush1.xpose.msra.mxu0 0.0
    %302 = vmatprep.subr.mxu0 0.0
    %303 = vmatpush1.xpose.msra.mxu0 0.0
    %304 = vmatprep.subr.mxu0 0.0
    %305 = vmatpush1.xpose.msra.mxu0 0.0
    %306 = vmatprep.subr.mxu0 0.0
    %307 = vmatpush1.xpose.msra.mxu0 0.0
    %308 = vmatprep.mubr.f32.mxu0 0.0
    %309 = vmatmul.mubr.f32.gmra.mrb[0].mxu0 %v239
    %v310 = vpop.f32.mrb[0].mxu0
    %v311 = vadd.f32 0.0, %v310
    %v312 = vpop.f32.mrb[0].mxu0
    %313 = vdwg.mxu0
    %s314 = sld [smem:[#allocation2]]
    %v315 = vstv %s314
    %v316 = vadd.f32 %v311, %v315
    %vm317 = vcmask 57344
    %318 = vst.msk [vmem:[#allocation3] sm:$0x1] %vm317, %v316
    // Predicated region
    $region38: #{tpu_custom_call.1} parent=1 // pred_check
      _
    $region39: #{tpu_custom_call.1} parent=1 // pred_check_branch
      %320 = sbr.rel (0) target = $region41
    $region40: #{tpu_custom_call.1} parent=1 // pred_region
      %s322 = ssub.s32 16, 16
      %323 = vsyncadd [#allocation4], %s322
      %s325 = sshll.u32 [#allocation3], 4
      %s326 = int_to_ptr.vmem [resolvable:$true] %s325
      %328 = dma.vmem_to_hbm [thread:$0]  %s326, 16, %s9, [#allocation4]
    $region41: #{tpu_custom_call.1} parent=1 // pred_fallthru
      _
    // Predicated region
    $region42: #{tpu_custom_call.1} parent=1 // pred_check
      _
    $region43: #{tpu_custom_call.1} parent=1 // pred_check_branch
      %330 = sbr.rel (0) target = $region45
    $region44: #{tpu_custom_call.1} parent=1 // pred_region
      %331 = dma.done [#allocation4], 16
    $region45: #{tpu_custom_call.1} parent=1 // pred_fallthru
      _
    %332 = vsyncpa [#allocation4], 1

// kernel: tpu_custom_call.1
$region0: #{tpu_custom_call.1}
  #allocation0 [shape = 'u32[]', space=smem, size = 0x4, offset = 0x4, fixed_abs, tag = 'smem constant byte address 0x4 - core index']
  #allocation1 [shape = 'u32[144,128]{1,0:T(1,128)}', space=vmem, size = 0x12000, scoped, tag = 'internal scratch']
  #allocation2 [shape = 'f32[1,1]{1,0:T(1,128)S(6)}', space=smem, size = 0x200, scoped, tag = 'scoped memory for tpu_custom_call.1']
  %s0 = inlined_call_operand.vmem [shape: f32[8,16], index: 0, kind: input, shape index: {}]
  %s1 = inlined_call_operand.vmem [shape: f32[8,48], index: 1, kind: input, shape index: {}]
  %s2 = inlined_call_operand.vmem [shape: bf16[16,32], index: 2, kind: input, shape index: {}]
  %s3 = inlined_call_operand.vmem [shape: bf16[48,32], index: 3, kind: input, shape index: {}]
  %s4 = inlined_call_operand.vmem [shape: f32[1,32], index: 4, kind: input, shape index: {}]
  %s5 = inlined_call_operand.vmem [shape: bf16[32,32], index: 5, kind: input, shape index: {}]
  %s6 = inlined_call_operand.vmem [shape: f32[1,32], index: 6, kind: input, shape index: {}]
  %s7 = inlined_call_operand.vmem [shape: f32[8,32], index: 7, kind: input, shape index: {}]
  %s8 = inlined_call_operand.<no memory space> [shape: f32[1,1], index: 8, kind: input, shape index: {}]
  %s9 = inlined_call_operand.hbm [shape: f32[1,1,8], index: 9, kind: output, shape index: {}]
  %s10 = sld [smem:[#allocation0]]
  $region46: #{tpu_custom_call.1} parent=0
    _
  %s12 = ssub.s32 1, %s10
  %s13 = scalar_select 0, %s12, %s10
  %14 = sst [smem:[#allocation2]] %s8
  $region1: #{tpu_custom_call.1} parent=0
    #allocation3 [shape = 'u8[512]{0}', space=vmem, size = 0x400, scoped, tag = 'output window, operand 0, single buffered']
    #allocation4 [shape = 's32[1]{0}', space=sflag, size = 0x4, scoped, tag = 'scoped memory for tpu_custom_call.1']
    %15 = vsyncpa [#allocation4], 0
    // Predicated region
    $region2: #{tpu_custom_call.1} parent=1 // pred_check
      _
    $region3: #{tpu_custom_call.1} parent=1 // pred_check_branch
      %17 = sbr.rel (0) target = $region5
    $region4: #{tpu_custom_call.1} parent=1 // pred_region
      _
    $region5: #{tpu_custom_call.1} parent=1 // pred_fallthru
      _
    // Predicated region
    $region6: #{tpu_custom_call.1} parent=1 // pred_check
      _
    $region7: #{tpu_custom_call.1} parent=1 // pred_check_branch
      %19 = sbr.rel (0) target = $region9
    $region8: #{tpu_custom_call.1} parent=1 // pred_region
      _
    $region9: #{tpu_custom_call.1} parent=1 // pred_fallthru
      _
    // Predicated region
    $region10: #{tpu_custom_call.1} parent=1 // pred_check
      _
    $region11: #{tpu_custom_call.1} parent=1 // pred_check_branch
      %21 = sbr.rel (0) target = $region13
    $region12: #{tpu_custom_call.1} parent=1 // pred_region
      _
    $region13: #{tpu_custom_call.1} parent=1 // pred_fallthru
      _
    // Predicated region
    $region14: #{tpu_custom_call.1} parent=1 // pred_check
      _
    $region15: #{tpu_custom_call.1} parent=1 // pred_check_branch
      %23 = sbr.rel (0) target = $region17
    $region16: #{tpu_custom_call.1} parent=1 // pred_region
      _
    $region17: #{tpu_custom_call.1} parent=1 // pred_fallthru
      _
    // Predicated region
    $region18: #{tpu_custom_call.1} parent=1 // pred_check
      _
    $region19: #{tpu_custom_call.1} parent=1 // pred_check_branch
      %25 = sbr.rel (0) target = $region21
    $region20: #{tpu_custom_call.1} parent=1 // pred_region
      _
    $region21: #{tpu_custom_call.1} parent=1 // pred_fallthru
      _
    // Predicated region
    $region22: #{tpu_custom_call.1} parent=1 // pred_check
      _
    $region23: #{tpu_custom_call.1} parent=1 // pred_check_branch
      %27 = sbr.rel (0) target = $region25
    $region24: #{tpu_custom_call.1} parent=1 // pred_region
      _
    $region25: #{tpu_custom_call.1} parent=1 // pred_fallthru
      _
    // Predicated region
    $region26: #{tpu_custom_call.1} parent=1 // pred_check
      _
    $region27: #{tpu_custom_call.1} parent=1 // pred_check_branch
      %29 = sbr.rel (0) target = $region29
    $region28: #{tpu_custom_call.1} parent=1 // pred_region
      _
    $region29: #{tpu_custom_call.1} parent=1 // pred_fallthru
      _
    // Predicated region
    $region30: #{tpu_custom_call.1} parent=1 // pred_check
      _
    $region31: #{tpu_custom_call.1} parent=1 // pred_check_branch
      %31 = sbr.rel (0) target = $region33
    $region32: #{tpu_custom_call.1} parent=1 // pred_region
      _
    $region33: #{tpu_custom_call.1} parent=1 // pred_fallthru
      _
    // Predicated region
    $region34: #{tpu_custom_call.1} parent=1 // pred_check
      _
    $region35: #{tpu_custom_call.1} parent=1 // pred_check_branch
      %33 = sbr.rel (0) target = $region37
    $region36: #{tpu_custom_call.1} parent=1 // pred_region
      _
    $region37: #{tpu_custom_call.1} parent=1 // pred_fallthru
      _
    %v35 = vld [vmem:[%s0] sm:$0xff]
    %v36 = vpack.c.bf16 %v35, %v35
    %v37 = vld [vmem:[%s1] sm:$0xff]
    %v38 = vpack.c.bf16 %v37, %v37
    %v39 = vld [vmem:[%s2] sm:$0xf]
    %v40 = vld [vmem:[%s2 + $0x4] sm:$0xf]
    %v41 = vld [vmem:[%s3] sm:$0xf]
    %v42 = vld [vmem:[%s3 + $0x4] sm:$0xf]
    %v43 = vld [vmem:[%s3 + $0x8] sm:$0xf]
    %v44 = vld [vmem:[%s3 + $0xc] sm:$0xf]
    %v45 = vld [vmem:[%s3 + $0x10] sm:$0xf]
    %v46 = vld [vmem:[%s3 + $0x14] sm:$0xf]
    %v53 = vunpack.c.l.b16 %v41
    %v54 = vunpack.c.l.b16 %v42
    %v55 = vunpack.c.l.b16 %v43
    %v56 = vunpack.c.l.b16 %v44
    %v57 = vunpack.c.l.b16 %v45
    %v58 = vunpack.c.l.b16 %v46
    %v59 = vpack.c.b16 %v54, %v53
    %v60 = vpack.c.b16 %v56, %v55
    %v61 = vpack.c.b16 %v58, %v57
    %vm65 = vcmask 392192
    %v67 = vsel %vm65, %v38, 0
    %69 = vmatprep.subr.bf16.mxu0 0
    %70 = vmatpush1.bf16.msra.mxu0 %v59
    %71 = vmatprep.subr.bf16.mxu0 0
    %72 = vmatpush1.bf16.msra.mxu0 %v60
    %73 = vmatprep.subr.bf16.mxu0 0
    %74 = vmatpush1.bf16.msra.mxu0 %v61
    %75 = vmatprep.subr.bf16.mxu0 0
    %76 = vmatpush1.bf16.msra.mxu0 0
    %77 = vmatprep.subr.bf16.mxu0 0
    %78 = vmatpush1.bf16.msra.mxu0 0
    %79 = vmatprep.subr.bf16.mxu0 0
    %80 = vmatpush1.bf16.msra.mxu0 0
    %81 = vmatprep.subr.bf16.mxu0 0
    %82 = vmatpush1.bf16.msra.mxu0 0
    %83 = vmatprep.subr.bf16.mxu0 0
    %84 = vmatpush1.bf16.msra.mxu0 0
    %85 = vmatprep.subr.bf16.mxu0 0
    %86 = vmatpush1.bf16.msra.mxu0 0
    %87 = vmatprep.subr.bf16.mxu0 0
    %88 = vmatpush1.bf16.msra.mxu0 0
    %89 = vmatprep.subr.bf16.mxu0 0
    %90 = vmatpush1.bf16.msra.mxu0 0
    %91 = vmatprep.subr.bf16.mxu0 0
    %92 = vmatpush1.bf16.msra.mxu0 0
    %93 = vmatprep.subr.bf16.mxu0 0
    %94 = vmatpush1.bf16.msra.mxu0 0
    %95 = vmatprep.subr.bf16.mxu0 0
    %96 = vmatpush1.bf16.msra.mxu0 0
    %97 = vmatprep.subr.bf16.mxu0 0
    %98 = vmatpush1.bf16.msra.mxu0 0
    %99 = vmatprep.subr.bf16.mxu0 0
    %100 = vmatpush1.bf16.msra.mxu0 0
    %101 = vmatprep.mubr.bf16.mxu0 0
    %102 = vmatmul.mubr.bf16.gmra.mrb[0].mxu0 %v67
    %v103 = vpop.f32.mrb[0].mxu0
    %v104 = vadd.f32 0.0, %v103
    %v105 = vpop.f32.mrb[0].mxu0
    %v106 = vpop.f32.mrb[0].mxu0
    %v107 = vpop.f32.mrb[0].mxu0
    %108 = vdwg.mxu0
    %v111 = vunpack.c.l.b16 %v39
    %v112 = vunpack.c.l.b16 %v40
    %v113 = vpack.c.b16 %v112, %v111
    %vm115 = vcmask 130048
    %v117 = vsel %vm115, %v36, 0
    %119 = vmatprep.subr.bf16.mxu0 0
    %120 = vmatpush1.bf16.msra.mxu0 %v113
    %121 = vmatprep.subr.bf16.mxu0 0
    %122 = vmatpush1.bf16.msra.mxu0 0
    %123 = vmatprep.subr.bf16.mxu0 0
    %124 = vmatpush1.bf16.msra.mxu0 0
    %125 = vmatprep.subr.bf16.mxu0 0
    %126 = vmatpush1.bf16.msra.mxu0 0
    %127 = vmatprep.subr.bf16.mxu0 0
    %128 = vmatpush1.bf16.msra.mxu0 0
    %129 = vmatprep.subr.bf16.mxu0 0
    %130 = vmatpush1.bf16.msra.mxu0 0
    %131 = vmatprep.subr.bf16.mxu0 0
    %132 = vmatpush1.bf16.msra.mxu0 0
    %133 = vmatprep.subr.bf16.mxu0 0
    %134 = vmatpush1.bf16.msra.mxu0 0
    %135 = vmatprep.subr.bf16.mxu0 0
    %136 = vmatpush1.bf16.msra.mxu0 0
    %137 = vmatprep.subr.bf16.mxu0 0
    %138 = vmatpush1.bf16.msra.mxu0 0
    %139 = vmatprep.subr.bf16.mxu0 0
    %140 = vmatpush1.bf16.msra.mxu0 0
    %141 = vmatprep.subr.bf16.mxu0 0
    %142 = vmatpush1.bf16.msra.mxu0 0
    %143 = vmatprep.subr.bf16.mxu0 0
    %144 = vmatpush1.bf16.msra.mxu0 0
    %145 = vmatprep.subr.bf16.mxu0 0
    %146 = vmatpush1.bf16.msra.mxu0 0
    %147 = vmatprep.subr.bf16.mxu0 0
    %148 = vmatpush1.bf16.msra.mxu0 0
    %149 = vmatprep.subr.bf16.mxu0 0
    %150 = vmatpush1.bf16.msra.mxu0 0
    %151 = vmatprep.mubr.bf16.mxu0 0
    %152 = vmatmul.mubr.bf16.gmra.mrb[0].mxu0 %v117
    %v153 = vpop.f32.mrb[0].mxu0
    %v154 = vadd.f32 %v104, %v153
    %v155 = vpop.f32.mrb[0].mxu0
    %v156 = vpop.f32.mrb[0].mxu0
    %v157 = vpop.f32.mrb[0].mxu0
    %158 = vdwg.mxu0
    %v159 = vld [vmem:[%s4] sm:$0x1]
    %v161 = vlaneseq
    %v162 = vshrl.u32 %v161, 7
    %v163 = vsub.s32 0, %v162
    %v164 = vrot.slane %v159, %v163
    %v166 = vadd.f32 %v154, %v164
    %v167 = vmax.f32 %v166, 0.0
    %v168 = vpack.c.bf16 %v167, %v167
    %v169 = vld [vmem:[%s5] sm:$0xf]
    %v170 = vld [vmem:[%s5 + $0x4] sm:$0xf]
    %v171 = vld [vmem:[%s5 + $0x8] sm:$0xf]
    %v172 = vld [vmem:[%s5 + $0xc] sm:$0xf]
    %v173 = vld [vmem:[%s6] sm:$0x1]
    %v175 = vlaneseq
    %v176 = vshrl.u32 %v175, 7
    %v177 = vsub.s32 0, %v176
    %v178 = vrot.slane %v173, %v177
    %v184 = vunpack.c.l.b16 %v169
    %v185 = vunpack.c.l.b16 %v170
    %v186 = vunpack.c.l.b16 %v171
    %v187 = vunpack.c.l.b16 %v172
    %v188 = vpack.c.b16 %v185, %v184
    %v189 = vpack.c.b16 %v187, %v186
    %vm192 = vcmask 261120
    %v194 = vsel %vm192, %v168, 0
    %196 = vmatprep.subr.bf16.mxu0 0
    %197 = vmatpush1.bf16.msra.mxu0 %v188
    %198 = vmatprep.subr.bf16.mxu0 0
    %199 = vmatpush1.bf16.msra.mxu0 %v189
    %200 = vmatprep.subr.bf16.mxu0 0
    %201 = vmatpush1.bf16.msra.mxu0 0
    %202 = vmatprep.subr.bf16.mxu0 0
    %203 = vmatpush1.bf16.msra.mxu0 0
    %204 = vmatprep.subr.bf16.mxu0 0
    %205 = vmatpush1.bf16.msra.mxu0 0
    %206 = vmatprep.subr.bf16.mxu0 0
    %207 = vmatpush1.bf16.msra.mxu0 0
    %208 = vmatprep.subr.bf16.mxu0 0
    %209 = vmatpush1.bf16.msra.mxu0 0
    %210 = vmatprep.subr.bf16.mxu0 0
    %211 = vmatpush1.bf16.msra.mxu0 0
    %212 = vmatprep.subr.bf16.mxu0 0
    %213 = vmatpush1.bf16.msra.mxu0 0
    %214 = vmatprep.subr.bf16.mxu0 0
    %215 = vmatpush1.bf16.msra.mxu0 0
    %216 = vmatprep.subr.bf16.mxu0 0
    %217 = vmatpush1.bf16.msra.mxu0 0
    %218 = vmatprep.subr.bf16.mxu0 0
    %219 = vmatpush1.bf16.msra.mxu0 0
    %220 = vmatprep.subr.bf16.mxu0 0
    %221 = vmatpush1.bf16.msra.mxu0 0
    %222 = vmatprep.subr.bf16.mxu0 0
    %223 = vmatpush1.bf16.msra.mxu0 0
    %224 = vmatprep.subr.bf16.mxu0 0
    %225 = vmatpush1.bf16.msra.mxu0 0
    %226 = vmatprep.subr.bf16.mxu0 0
    %227 = vmatpush1.bf16.msra.mxu0 0
    %228 = vmatprep.mubr.bf16.mxu0 0
    %229 = vmatmul.mubr.bf16.gmra.mrb[0].mxu0 %v194
    %v230 = vpop.f32.mrb[0].mxu0
    %v231 = vadd.f32 %v178, %v230
    %v232 = vpop.f32.mrb[0].mxu0
    %v233 = vpop.f32.mrb[0].mxu0
    %v234 = vpop.f32.mrb[0].mxu0
    %235 = vdwg.mxu0
    %v236 = vmax.f32 %v231, 0.0
    %v237 = vld [vmem:[%s7] sm:$0xff]
    %v239 = vsel %vm192, %v237, 0
    %v242 = vsel %vm192, %v236, 0
    %244 = vmatprep.subr.mxu0 0.0
    %245 = vmatpush1.xpose.msra.mxu0 %v242
    %246 = vmatprep.subr.mxu0 0.0
    %247 = vmatpush1.xpose.msra.mxu0 0.0
    %248 = vmatprep.subr.mxu0 0.0
    %249 = vmatpush1.xpose.msra.mxu0 0.0
    %250 = vmatprep.subr.mxu0 0.0
    %251 = vmatpush1.xpose.msra.mxu0 0.0
    %252 = vmatprep.subr.mxu0 0.0
    %253 = vmatpush1.xpose.msra.mxu0 0.0
    %254 = vmatprep.subr.mxu0 0.0
    %255 = vmatpush1.xpose.msra.mxu0 0.0
    %256 = vmatprep.subr.mxu0 0.0
    %257 = vmatpush1.xpose.msra.mxu0 0.0
    %258 = vmatprep.subr.mxu0 0.0
    %259 = vmatpush1.xpose.msra.mxu0 0.0
    %260 = vmatprep.subr.mxu0 0.0
    %261 = vmatpush1.xpose.msra.mxu0 0.0
    %262 = vmatprep.subr.mxu0 0.0
    %263 = vmatpush1.xpose.msra.mxu0 0.0
    %264 = vmatprep.subr.mxu0 0.0
    %265 = vmatpush1.xpose.msra.mxu0 0.0
    %266 = vmatprep.subr.mxu0 0.0
    %267 = vmatpush1.xpose.msra.mxu0 0.0
    %268 = vmatprep.subr.mxu0 0.0
    %269 = vmatpush1.xpose.msra.mxu0 0.0
    %270 = vmatprep.subr.mxu0 0.0
    %271 = vmatpush1.xpose.msra.mxu0 0.0
    %272 = vmatprep.subr.mxu0 0.0
    %273 = vmatpush1.xpose.msra.mxu0 0.0
    %274 = vmatprep.subr.mxu0 0.0
    %275 = vmatpush1.xpose.msra.mxu0 0.0
    %276 = vmatprep.subr.mxu0 0.0
    %277 = vmatpush1.xpose.msra.mxu0 0.0
    %278 = vmatprep.subr.mxu0 0.0
    %279 = vmatpush1.xpose.msra.mxu0 0.0
    %280 = vmatprep.subr.mxu0 0.0
    %281 = vmatpush1.xpose.msra.mxu0 0.0
    %282 = vmatprep.subr.mxu0 0.0
    %283 = vmatpush1.xpose.msra.mxu0 0.0
    %284 = vmatprep.subr.mxu0 0.0
    %285 = vmatpush1.xpose.msra.mxu0 0.0
    %286 = vmatprep.subr.mxu0 0.0
    %287 = vmatpush1.xpose.msra.mxu0 0.0
    %288 = vmatprep.subr.mxu0 0.0
    %289 = vmatpush1.xpose.msra.mxu0 0.0
    %290 = vmatprep.subr.mxu0 0.0
    %291 = vmatpush1.xpose.msra.mxu0 0.0
    %292 = vmatprep.subr.mxu0 0.0
    %293 = vmatpush1.xpose.msra.mxu0 0.0
    %294 = vmatprep.subr.mxu0 0.0
    %295 = vmatpush1.xpose.msra.mxu0 0.0
    %296 = vmatprep.subr.mxu0 0.0
    %297 = vmatpush1.xpose.msra.mxu0 0.0
    %298 = vmatprep.subr.mxu0 0.0
    %299 = vmatpush1.xpose.msra.mxu0 0.0
    %300 = vmatprep.subr.mxu0 0.0
    %301 = vmatpush1.xpose.msra.mxu0 0.0
    %302 = vmatprep.subr.mxu0 0.0
    %303 = vmatpush1.xpose.msra.mxu0 0.0
    %304 = vmatprep.subr.mxu0 0.0
    %305 = vmatpush1.xpose.msra.mxu0 0.0
    %306 = vmatprep.subr.mxu0 0.0
    %307 = vmatpush1.xpose.msra.mxu0 0.0
    %308 = vmatprep.mubr.f32.mxu0 0.0
    %309 = vmatmul.mubr.f32.gmra.mrb[0].mxu0 %v239
    %v310 = vpop.f32.mrb[0].mxu0
    %v311 = vadd.f32 0.0, %v310
    %v312 = vpop.f32.mrb[0].mxu0
    %313 = vdwg.mxu0
    %s314 = sld [smem:[#allocation2]]
    %v315 = vstv %s314
    %v316 = vadd.f32 %v311, %v315
    %vm317 = vcmask 57344
    %318 = vst.msk [vmem:[#allocation3] sm:$0x1] %vm317, %v316
    // Predicated region
    $region38: #{tpu_custom_call.1} parent=1 // pred_check
      _
    $region39: #{tpu_custom_call.1} parent=1 // pred_check_branch
      %320 = sbr.rel (0) target = $region41
    $region40: #{tpu_custom_call.1} parent=1 // pred_region
      %s322 = ssub.s32 16, 16
      %323 = vsyncadd [#allocation4], %s322
      %s325 = sshll.u32 [#allocation3], 4
      %s326 = int_to_ptr.vmem [resolvable:$true] %s325
      %328 = dma.vmem_to_hbm [thread:$0]  %s326, 16, %s9, [#allocation4]
    $region41: #{tpu_custom_call.1} parent=1 // pred_fallthru
      _
    // Predicated region
    $region42: #{tpu_custom_call.1} parent=1 // pred_check
      _
    $region43: #{tpu_custom_call.1} parent=1 // pred_check_branch
      %330 = sbr.rel (0) target = $region45
    $region44: #{tpu_custom_call.1} parent=1 // pred_region
      %331 = dma.done [#allocation4], 16
    $region45: #{tpu_custom_call.1} parent=1 // pred_fallthru
      _
    %332 = vsyncpa [#allocation4], 1

</llo_original>
